<compile_context>
chip_gen: v5e
topology: v5e:2x2
jax: 0.10.0
libtpu: 0.0.40
codegen_flags: <defaults>
</compile_context>

<pallas_src>
import numpy as np
import jax
import jax.numpy as jnp
from jax.experimental import pallas as pl
from jax.experimental.pallas import tpu as pltpu  # noqa: F401  (TPU backend module)

# ----------------------------- small config (consistent with the module) -------------
BATCH = 2
SEQ = 16
DIM = 32
NUM_HEADS = 4
HEAD_DIM = DIM // NUM_HEADS          # 8
MLP_RATIO = 4.0
MLP_HIDDEN = int(DIM * MLP_RATIO)    # 128
EPS = 1e-6

T = BATCH * SEQ                      # 32 packed tokens
HT = NUM_HEADS * T                   # 128 (head-expanded key axis / lane-dense)

# packed bf16 weight slab layout (rows, 128 lanes)
WROW_QKV = 0                         # (32, 96) qkv_w (LN1/scale folded), zero-padded to 128 lanes
WROW_FC1 = DIM                       # (32, 128) fc1_w (LN2 folded)
WROW_FC2T = 2 * DIM                  # (32, 128) fc2_w.T
WROW_PROJ = 3 * DIM                  # (32, 32)  proj_w
W_ROWS = 4 * DIM                     # 128

# packed f32 constant slab layout (rows, 128 lanes)
ROW_BIAS = 8                         # (32, 128) expanded block-diagonal attention bias
ROW_HMASK = ROW_BIAS + T             # (128, 32) per-head lane mask for sublane-tiled K/V
ROW_BONES = ROW_HMASK + HT           # (128, 128) block-diagonal ones (softmax denominators)
C_ROWS = ROW_BONES + HT              # 296


# ----------------------------- in-kernel math helpers --------------------------------
def _norm(x):
    # LayerNorm WITHOUT affine: gamma/beta are folded into the following matmul weights.
    mu = jnp.mean(x, axis=-1, keepdims=True)
    xc = x - mu
    var = jnp.mean(xc * xc, axis=-1, keepdims=True)
    return xc * jax.lax.rsqrt(var + EPS)


def _gelu_exact(x):
    # matches torch.nn.GELU() (erf based), f32 VPU math
    return 0.5 * x * (1.0 + jax.lax.erf(x * (1.0 / np.sqrt(2.0))))


def _dot(a, b):
    return jnp.dot(a, b, preferred_element_type=jnp.float32)


def _dot_nt(a, b):
    # a @ b.T without an explicit transpose (MXU-native)
    return jax.lax.dot_general(a, b, (((1,), (1,)), ((), ())),
                               preferred_element_type=jnp.float32)


# ----------------------------- the fused Block kernel --------------------------------
def _block_kernel(x_ref, w_ref, c_ref, o_ref):
    bf16 = jnp.bfloat16
    x = x_ref[...]                                         # (T, D) f32

    # ---- static views into the packed slabs (no per-input DMAs) ----
    qkv_w = w_ref[WROW_QKV:WROW_QKV + DIM, :]              # (32,128) bf16 (cols 96:128 are zero)
    fc1_w = w_ref[WROW_FC1:WROW_FC1 + DIM, :]              # (32,128) bf16
    fc2_wt = w_ref[WROW_FC2T:WROW_FC2T + DIM, :]           # (32,128) bf16 == fc2_w.T
    proj_w = w_ref[WROW_PROJ:WROW_PROJ + DIM, 0:DIM]       # (32,32)  bf16

    qkv_b = c_ref[0:1, :]                                  # (1,128) f32 (lanes 96:128 zero)
    fc1_b = c_ref[1:2, :]                                  # (1,128) f32
    proj_b = c_ref[2:3, 0:DIM]                             # (1,32)  f32
    fc2_b = c_ref[3:4, 0:DIM]                              # (1,32)  f32
    bias = c_ref[ROW_BIAS:ROW_BIAS + T, :]                 # (32,128) block-diag attn bias (f32)
    hmask = c_ref[ROW_HMASK:ROW_HMASK + HT, 0:DIM]         # (128,32) per-head lane mask (f32)
    bones = c_ref[ROW_BONES:ROW_BONES + HT, :]             # (128,128) block-diag ones (f32)

    # ---------------- attention branch ----------------
    n1 = _norm(x)                                          # f32 (LN affine folded into qkv_w/b)
    qkv = _dot(n1.astype(bf16), qkv_w) + qkv_b             # (32,128) f32; scale folded into Q cols
    q = qkv[:, 0:DIM]                                      # (32,32)
    k = qkv[:, DIM:2 * DIM]
    v = qkv[:, 2 * DIM:3 * DIM]

    # tile K / V 4x along sublanes and mask per head -> lane/sublane-dense operands
    k_t = jnp.concatenate([k] * NUM_HEADS, axis=0) * hmask     # (128,32) f32
    v_t = jnp.concatenate([v] * NUM_HEADS, axis=0) * hmask     # (128,32) f32

    # all-head scores in ONE matmul: (32,32) . (128,32)^T -> (32,128)
    s = _dot_nt(q.astype(bf16), k_t.astype(bf16)) + bias       # f32; -1e30 mask stays f32
    s = s - jnp.max(s, axis=-1, keepdims=True)                 # global row max (valid per block)
    e = jnp.exp(s)                                             # f32 (masked entries -> 0)
    # per-(row, head-block) denominators via one f32 matmul against block-diag ones
    denom = jnp.dot(e, bones, preferred_element_type=jnp.float32)   # (32,128)
    p = e * pl.reciprocal(denom, approx=True)                  # softmax probabilities (f32)

    # proj-folded PV: VW = (V_tiled*mask) @ W_proj, then out = P @ VW  (2 dense matmuls,
    # subsumes per-head accumulation / MRB accumulate on v7x)
    vw = _dot(v_t.astype(bf16), proj_w)                        # (128,32) f32
    attn = _dot(p.astype(bf16), vw.astype(bf16)) + proj_b      # (32,32) f32
    x1 = x + attn

    # ---------------- MLP branch ----------------
    n2 = _norm(x1)                                             # LN affine folded into fc1_w/b
    h = _dot(n2.astype(bf16), fc1_w) + fc1_b                   # (32,128) lane-dense
    h = _gelu_exact(h)                                         # f32
    y = _dot_nt(h.astype(bf16), fc2_wt) + fc2_b                # (32,32)
    o_ref[...] = (x1 + y).astype(o_ref.dtype)


# ----------------------------- wrapper -----------------------------------------------
@jax.jit
def block_forward(x, w_slab, c_slab):
    B, N, D = x.shape
    xf = x.reshape(B * N, D)   # fold batch into the token/sublane axis (layout no-op in glue)
    out = pl.pallas_call(
        _block_kernel,
        out_shape=jax.ShapeDtypeStruct((B * N, D), jnp.float32),
        # no grid: single fused invocation, whole-array VMEM blocks (<~200 KB resident),
        # so no tiling / pipelining / vmem_limit tuning is needed on any generation.
    )(xf, w_slab, c_slab)
    return out.reshape(B, N, D)


# ----------------------------- parameters (deterministic) ----------------------------
def init_params(key):
    ks = jax.random.split(key, 11)

    def nrm(k, shape, std=0.02):
        return (std * jax.random.normal(k, shape)).astype(jnp.float32)

    return {
        # non-trivial LayerNorm affines to exercise the weight folding
        "n1_g": (1.0 + 0.1 * jax.random.normal(ks[0], (DIM,))).astype(jnp.float32),
        "n1_b": (0.05 * jax.random.normal(ks[1], (DIM,))).astype(jnp.float32),
        "qkv_w": nrm(ks[2], (DIM, 3 * DIM)),     # qkv_bias=False in the module spec
        "proj_w": nrm(ks[3], (DIM, DIM)),
        "proj_b": nrm(ks[4], (DIM,)),
        "n2_g": (1.0 + 0.1 * jax.random.normal(ks[5], (DIM,))).astype(jnp.float32),
        "n2_b": (0.05 * jax.random.normal(ks[6], (DIM,))).astype(jnp.float32),
        "fc1_w": nrm(ks[7], (DIM, MLP_HIDDEN)),
        "fc1_b": nrm(ks[8], (MLP_HIDDEN,)),
        "fc2_w": nrm(ks[9], (MLP_HIDDEN, DIM)),
        "fc2_b": nrm(ks[10], (DIM,)),
    }


def pack_params(params):
    """Fold LN affines / attention scale into the weights (in f32, single bf16 cast) and
    pack everything into one bf16 weight slab + one f32 constant slab (built once, host side)."""
    p = {k: np.asarray(v, dtype=np.float32) for k, v in params.items()}
    scale = float(HEAD_DIM) ** (-0.5)

    # ---- fold LayerNorm gamma/beta + attention scale (all in f32) ----
    qkv_w_f = p["n1_g"][:, None] * p["qkv_w"]              # (D, 3D)
    qkv_b_f = p["n1_b"] @ p["qkv_w"]                       # (3D,)   (module qkv bias = 0)
    qkv_w_f[:, :DIM] *= scale                              # fold 1/sqrt(hd) into Q columns
    qkv_b_f[:DIM] *= scale
    fc1_w_f = p["n2_g"][:, None] * p["fc1_w"]              # (D, 128)
    fc1_b_f = p["fc1_b"] + p["n2_b"] @ p["fc1_w"]          # (128,)

    # ---- bf16 weight slab (128, 128) ----
    w = np.zeros((W_ROWS, 128), np.float32)
    w[WROW_QKV:WROW_QKV + DIM, 0:3 * DIM] = qkv_w_f
    w[WROW_FC1:WROW_FC1 + DIM, :] = fc1_w_f
    w[WROW_FC2T:WROW_FC2T + DIM, :] = p["fc2_w"].T
    w[WROW_PROJ:WROW_PROJ + DIM, 0:DIM] = p["proj_w"]
    w_slab = jnp.asarray(w).astype(jnp.bfloat16)

    # ---- f32 constant slab (296, 128) ----
    c = np.zeros((C_ROWS, 128), np.float32)
    c[0, 0:3 * DIM] = qkv_b_f
    c[1, :] = fc1_b_f
    c[2, 0:DIM] = p["proj_b"]
    c[3, 0:DIM] = p["fc2_b"]
    # expanded block-diagonal attention bias (T, H*T): attend only within the same batch elem
    same = (np.arange(T)[:, None] // SEQ) == (np.arange(T)[None, :] // SEQ)
    c[ROW_BIAS:ROW_BIAS + T, :] = np.tile(np.where(same, 0.0, -1e30).astype(np.float32),
                                          (1, NUM_HEADS))
    # per-head lane mask for the sublane-tiled K / V  (H*T, D)
    hm = np.zeros((HT, DIM), np.float32)
    for h in range(NUM_HEADS):
        hm[h * T:(h + 1) * T, h * HEAD_DIM:(h + 1) * HEAD_DIM] = 1.0
    c[ROW_HMASK:ROW_HMASK + HT, 0:DIM] = hm
    # block-diagonal ones (H*T, H*T) -> per-head softmax denominators in one matmul
    bo = np.zeros((HT, HT), np.float32)
    for h in range(NUM_HEADS):
        bo[h * T:(h + 1) * T, h * T:(h + 1) * T] = 1.0
    c[ROW_BONES:ROW_BONES + HT, :] = bo
    c_slab = jnp.asarray(c)
    return w_slab, c_slab


# ----------------------------- pure-JAX reference (f32, unfused/unfolded) ------------
def block_reference(x, params, num_heads=NUM_HEADS):
    B, N, D = x.shape
    hd = D // num_heads

    def ln(v, g, b):
        mu = jnp.mean(v, axis=-1, keepdims=True)
        var = jnp.mean((v - mu) ** 2, axis=-1, keepdims=True)
        return (v - mu) / jnp.sqrt(var + EPS) * g + b

    h = ln(x, params["n1_g"], params["n1_b"])
    qkv = h @ params["qkv_w"]                                       # qkv_bias=False
    qkv = qkv.reshape(B, N, 3, num_heads, hd).transpose(2, 0, 3, 1, 4)
    q, k, v = qkv[0], qkv[1], qkv[2]                                # (B, H, N, hd)
    att = jax.nn.softmax((q @ jnp.swapaxes(k, -1, -2)) * (hd ** -0.5), axis=-1)
    ctx = (att @ v).transpose(0, 2, 1, 3).reshape(B, N, D)
    x = x + ctx @ params["proj_w"] + params["proj_b"]
    h2 = ln(x, params["n2_g"], params["n2_b"])
    h2 = h2 @ params["fc1_w"] + params["fc1_b"]
    h2 = 0.5 * h2 * (1.0 + jax.lax.erf(h2 / np.sqrt(2.0)))
    return x + h2 @ params["fc2_w"] + params["fc2_b"]


# ----------------------------- main ---------------------------------------------------
if __name__ == "__main__":
    root = jax.random.PRNGKey(0)
    k_param, k_input = jax.random.split(root)
    params = init_params(k_param)
    w_slab, c_slab = pack_params(params)                 # built once, not per call
    x = jax.random.normal(k_input, (BATCH, SEQ, DIM), jnp.float32)

    out = jax.block_until_ready(block_forward(x, w_slab, c_slab))
    assert out.shape == (BATCH, SEQ, DIM)
    assert bool(jnp.all(jnp.isfinite(out)))

    ref = block_reference(x, params)
    max_err = float(jnp.max(jnp.abs(out - ref)))
    assert max_err < 5e-2, f"mismatch vs reference: max abs err {max_err}"
    print("KERNEL_OK")
</pallas_src>

<mosaic_0001>
module attributes {stable_mosaic.version = 11 : i64} {
  func.func @_block_kernel(%arg0: memref<32x32xf32, #tpu.memory_space<vmem>>, %arg1: memref<128x128xbf16, #tpu.memory_space<vmem>>, %arg2: memref<296x128xf32, #tpu.memory_space<vmem>>, %arg3: memref<32x32xf32, #tpu.memory_space<vmem>>) attributes {dimension_semantics = [], scalar_prefetch = 0 : i64, scratch_operands = 0 : i64, tpu.core_type = #tpu.core_type<tc>} {
    %c0 = arith.constant 0 : index
    %c0_0 = arith.constant 0 : index
    %0 = vector.load %arg0[%c0, %c0_0] : memref<32x32xf32, #tpu.memory_space<vmem>>, vector<32x32xf32>
    %c0_1 = arith.constant 0 : index
    %c0_2 = arith.constant 0 : index
    %1 = vector.load %arg1[%c0_1, %c0_2] : memref<128x128xbf16, #tpu.memory_space<vmem>>, vector<32x128xbf16>
    %c32 = arith.constant 32 : index
    %c0_3 = arith.constant 0 : index
    %2 = vector.load %arg1[%c32, %c0_3] : memref<128x128xbf16, #tpu.memory_space<vmem>>, vector<32x128xbf16>
    %c64 = arith.constant 64 : index
    %c0_4 = arith.constant 0 : index
    %3 = vector.load %arg1[%c64, %c0_4] : memref<128x128xbf16, #tpu.memory_space<vmem>>, vector<32x128xbf16>
    %c96 = arith.constant 96 : index
    %c0_5 = arith.constant 0 : index
    %4 = vector.load %arg1[%c96, %c0_5] : memref<128x128xbf16, #tpu.memory_space<vmem>>, vector<32x32xbf16>
    %c0_6 = arith.constant 0 : index
    %c0_7 = arith.constant 0 : index
    %5 = vector.load %arg2[%c0_6, %c0_7] : memref<296x128xf32, #tpu.memory_space<vmem>>, vector<1x128xf32>
    %c1 = arith.constant 1 : index
    %c0_8 = arith.constant 0 : index
    %6 = vector.load %arg2[%c1, %c0_8] : memref<296x128xf32, #tpu.memory_space<vmem>>, vector<1x128xf32>
    %c2 = arith.constant 2 : index
    %c0_9 = arith.constant 0 : index
    %7 = vector.load %arg2[%c2, %c0_9] : memref<296x128xf32, #tpu.memory_space<vmem>>, vector<1x32xf32>
    %c3 = arith.constant 3 : index
    %c0_10 = arith.constant 0 : index
    %8 = vector.load %arg2[%c3, %c0_10] : memref<296x128xf32, #tpu.memory_space<vmem>>, vector<1x32xf32>
    %c8 = arith.constant 8 : index
    %c0_11 = arith.constant 0 : index
    %9 = vector.load %arg2[%c8, %c0_11] : memref<296x128xf32, #tpu.memory_space<vmem>>, vector<32x128xf32>
    %c40 = arith.constant 40 : index
    %c0_12 = arith.constant 0 : index
    %10 = vector.load %arg2[%c40, %c0_12] : memref<296x128xf32, #tpu.memory_space<vmem>>, vector<128x32xf32>
    %c168 = arith.constant 168 : index
    %c0_13 = arith.constant 0 : index
    %11 = vector.load %arg2[%c168, %c0_13] : memref<296x128xf32, #tpu.memory_space<vmem>>, vector<128x128xf32>
    %cst = arith.constant dense<0.000000e+00> : vector<32xf32>
    %12 = vector.multi_reduction <add>, %0, %cst [1] : vector<32x32xf32> to vector<32xf32>
    %13 = vector.shape_cast %12 : vector<32xf32> to vector<32x1xf32>
    %cst_14 = arith.constant 3.200000e+01 : f32
    %14 = vector.broadcast %cst_14 : f32 to vector<32x1xf32>
    %15 = arith.divf %13, %14 : vector<32x1xf32>
    %16 = vector.broadcast %15 : vector<32x1xf32> to vector<32x32xf32>
    %17 = arith.subf %0, %16 : vector<32x32xf32>
    %18 = arith.mulf %17, %17 : vector<32x32xf32>
    %cst_15 = arith.constant dense<0.000000e+00> : vector<32xf32>
    %19 = vector.multi_reduction <add>, %18, %cst_15 [1] : vector<32x32xf32> to vector<32xf32>
    %20 = vector.shape_cast %19 : vector<32xf32> to vector<32x1xf32>
    %cst_16 = arith.constant 3.200000e+01 : f32
    %21 = vector.broadcast %cst_16 : f32 to vector<32x1xf32>
    %22 = arith.divf %20, %21 : vector<32x1xf32>
    %cst_17 = arith.constant 9.99999997E-7 : f32
    %23 = vector.broadcast %cst_17 : f32 to vector<32x1xf32>
    %24 = arith.addf %22, %23 : vector<32x1xf32>
    %25 = math.rsqrt %24 : vector<32x1xf32>
    %26 = vector.broadcast %25 : vector<32x1xf32> to vector<32x32xf32>
    %27 = arith.mulf %17, %26 : vector<32x32xf32>
    %28 = arith.truncf %27 : vector<32x32xf32> to vector<32x32xbf16>
    %cst_18 = arith.constant dense<0.000000e+00> : vector<32x128xf32>
    %29 = tpu.matmul %28, %1, %cst_18 {dimension_numbers = #tpu.dot_dimension_numbers<[1], [0], [0], [1], [0, 0, 1, 1], [], []>} : vector<32x32xbf16>, vector<32x128xbf16>, vector<32x128xf32> -> vector<32x128xf32>
    %30 = vector.broadcast %5 : vector<1x128xf32> to vector<32x128xf32>
    %31 = arith.addf %29, %30 : vector<32x128xf32>
    %32 = vector.extract_strided_slice %31 {offsets = [0, 0], sizes = [32, 32], strides = [1, 1]} : vector<32x128xf32> to vector<32x32xf32>
    %33 = vector.extract_strided_slice %31 {offsets = [0, 32], sizes = [32, 32], strides = [1, 1]} : vector<32x128xf32> to vector<32x32xf32>
    %34 = vector.extract_strided_slice %31 {offsets = [0, 64], sizes = [32, 32], strides = [1, 1]} : vector<32x128xf32> to vector<32x32xf32>
    %35 = tpu.concatenate %33, %33, %33, %33 in 0 : vector<32x32xf32>, vector<32x32xf32>, vector<32x32xf32>, vector<32x32xf32> -> vector<128x32xf32>
    %36 = arith.mulf %35, %10 : vector<128x32xf32>
    %37 = tpu.concatenate %34, %34, %34, %34 in 0 : vector<32x32xf32>, vector<32x32xf32>, vector<32x32xf32>, vector<32x32xf32> -> vector<128x32xf32>
    %38 = arith.mulf %37, %10 : vector<128x32xf32>
    %39 = arith.truncf %32 : vector<32x32xf32> to vector<32x32xbf16>
    %40 = arith.truncf %36 : vector<128x32xf32> to vector<128x32xbf16>
    %cst_19 = arith.constant dense<0.000000e+00> : vector<32x128xf32>
    %41 = tpu.matmul %39, %40, %cst_19 {dimension_numbers = #tpu.dot_dimension_numbers<[1], [1], [0], [0], [0, 0, 1, 0], [], []>} : vector<32x32xbf16>, vector<128x32xbf16>, vector<32x128xf32> -> vector<32x128xf32>
    %42 = arith.addf %41, %9 : vector<32x128xf32>
    %cst_20 = arith.constant dense<0xFF800000> : vector<32xf32>
    %43 = vector.multi_reduction <maximumf>, %42, %cst_20 [1] : vector<32x128xf32> to vector<32xf32>
    %44 = vector.shape_cast %43 : vector<32xf32> to vector<32x1xf32>
    %45 = vector.broadcast %44 : vector<32x1xf32> to vector<32x128xf32>
    %46 = arith.subf %42, %45 : vector<32x128xf32>
    %47 = math.exp %46 : vector<32x128xf32>
    %cst_21 = arith.constant dense<0.000000e+00> : vector<32x128xf32>
    %48 = tpu.matmul %47, %11, %cst_21 {dimension_numbers = #tpu.dot_dimension_numbers<[1], [0], [0], [1], [0, 0, 1, 1], [], []>} : vector<32x128xf32>, vector<128x128xf32>, vector<32x128xf32> -> vector<32x128xf32>
    %49 = tpu.reciprocal %48 {approx = true} : vector<32x128xf32> -> vector<32x128xf32>
    %50 = arith.mulf %47, %49 : vector<32x128xf32>
    %51 = arith.truncf %38 : vector<128x32xf32> to vector<128x32xbf16>
    %cst_22 = arith.constant dense<0.000000e+00> : vector<128x32xf32>
    %52 = tpu.matmul %51, %4, %cst_22 {dimension_numbers = #tpu.dot_dimension_numbers<[1], [0], [0], [1], [0, 0, 1, 1], [], []>} : vector<128x32xbf16>, vector<32x32xbf16>, vector<128x32xf32> -> vector<128x32xf32>
    %53 = arith.truncf %50 : vector<32x128xf32> to vector<32x128xbf16>
    %54 = arith.truncf %52 : vector<128x32xf32> to vector<128x32xbf16>
    %cst_23 = arith.constant dense<0.000000e+00> : vector<32x32xf32>
    %55 = tpu.matmul %53, %54, %cst_23 {dimension_numbers = #tpu.dot_dimension_numbers<[1], [0], [0], [1], [0, 0, 1, 1], [], []>} : vector<32x128xbf16>, vector<128x32xbf16>, vector<32x32xf32> -> vector<32x32xf32>
    %56 = vector.broadcast %7 : vector<1x32xf32> to vector<32x32xf32>
    %57 = arith.addf %55, %56 : vector<32x32xf32>
    %58 = arith.addf %0, %57 : vector<32x32xf32>
    %cst_24 = arith.constant dense<0.000000e+00> : vector<32xf32>
    %59 = vector.multi_reduction <add>, %58, %cst_24 [1] : vector<32x32xf32> to vector<32xf32>
    %60 = vector.shape_cast %59 : vector<32xf32> to vector<32x1xf32>
    %cst_25 = arith.constant 3.200000e+01 : f32
    %61 = vector.broadcast %cst_25 : f32 to vector<32x1xf32>
    %62 = arith.divf %60, %61 : vector<32x1xf32>
    %63 = vector.broadcast %62 : vector<32x1xf32> to vector<32x32xf32>
    %64 = arith.subf %58, %63 : vector<32x32xf32>
    %65 = arith.mulf %64, %64 : vector<32x32xf32>
    %cst_26 = arith.constant dense<0.000000e+00> : vector<32xf32>
    %66 = vector.multi_reduction <add>, %65, %cst_26 [1] : vector<32x32xf32> to vector<32xf32>
    %67 = vector.shape_cast %66 : vector<32xf32> to vector<32x1xf32>
    %cst_27 = arith.constant 3.200000e+01 : f32
    %68 = vector.broadcast %cst_27 : f32 to vector<32x1xf32>
    %69 = arith.divf %67, %68 : vector<32x1xf32>
    %cst_28 = arith.constant 9.99999997E-7 : f32
    %70 = vector.broadcast %cst_28 : f32 to vector<32x1xf32>
    %71 = arith.addf %69, %70 : vector<32x1xf32>
    %72 = math.rsqrt %71 : vector<32x1xf32>
    %73 = vector.broadcast %72 : vector<32x1xf32> to vector<32x32xf32>
    %74 = arith.mulf %64, %73 : vector<32x32xf32>
    %75 = arith.truncf %74 : vector<32x32xf32> to vector<32x32xbf16>
    %cst_29 = arith.constant dense<0.000000e+00> : vector<32x128xf32>
    %76 = tpu.matmul %75, %2, %cst_29 {dimension_numbers = #tpu.dot_dimension_numbers<[1], [0], [0], [1], [0, 0, 1, 1], [], []>} : vector<32x32xbf16>, vector<32x128xbf16>, vector<32x128xf32> -> vector<32x128xf32>
    %77 = vector.broadcast %6 : vector<1x128xf32> to vector<32x128xf32>
    %78 = arith.addf %76, %77 : vector<32x128xf32>
    %cst_30 = arith.constant 5.000000e-01 : f32
    %79 = vector.broadcast %cst_30 : f32 to vector<32x128xf32>
    %80 = arith.mulf %79, %78 : vector<32x128xf32>
    %cst_31 = arith.constant 0.707106769 : f32
    %81 = vector.broadcast %cst_31 : f32 to vector<32x128xf32>
    %82 = arith.mulf %78, %81 : vector<32x128xf32>
    %83 = math.erf %82 : vector<32x128xf32>
    %cst_32 = arith.constant 1.000000e+00 : f32
    %84 = vector.broadcast %cst_32 : f32 to vector<32x128xf32>
    %85 = arith.addf %84, %83 : vector<32x128xf32>
    %86 = arith.mulf %80, %85 : vector<32x128xf32>
    %87 = arith.truncf %86 : vector<32x128xf32> to vector<32x128xbf16>
    %cst_33 = arith.constant dense<0.000000e+00> : vector<32x32xf32>
    %88 = tpu.matmul %87, %3, %cst_33 {dimension_numbers = #tpu.dot_dimension_numbers<[1], [1], [0], [0], [0, 0, 1, 0], [], []>} : vector<32x128xbf16>, vector<32x128xbf16>, vector<32x32xf32> -> vector<32x32xf32>
    %89 = vector.broadcast %8 : vector<1x32xf32> to vector<32x32xf32>
    %90 = arith.addf %88, %89 : vector<32x32xf32>
    %91 = arith.addf %58, %90 : vector<32x32xf32>
    %c0_34 = arith.constant 0 : index
    %c0_35 = arith.constant 0 : index
    %92 = vector.load %arg3[%c0_34, %c0_35] : memref<32x32xf32, #tpu.memory_space<vmem>>, vector<32x32xf32>
    tpu.vector_store %arg3[%c0_34, %c0_35], %91 {strides = array<i32>} : memref<32x32xf32, #tpu.memory_space<vmem>>, vector<32x32xf32>,
    return
  }
}

</mosaic_0001>

<llo_original>
// kernel: block_forward.1
$region0: #{block_forward.1}
  #allocation0 [shape = 'u32[]', space=smem, size = 0x4, offset = 0x4, fixed_abs, tag = 'smem constant byte address 0x4 - core index']
  #allocation1 [shape = 'u32[72,128]{1,0:T(1,128)}', space=vmem, size = 0x9000, scoped, tag = 'internal scratch']
  %s0 = inlined_call_operand.hbm [shape: f32[32,32], index: 0, kind: input, shape index: {}]
  %s1 = inlined_call_operand.hbm [shape: bf16[128,128], index: 1, kind: input, shape index: {}]
  %s2 = inlined_call_operand.hbm [shape: f32[296,128], index: 2, kind: input, shape index: {}]
  %s3 = inlined_call_operand.hbm [shape: f32[32,32], index: 3, kind: output, shape index: {}]
  %s4 = sld [smem:[#allocation0]]
  $region34: #{block_forward.1} parent=0
    _
  %s6 = ssub.s32 1, %s4
  %s7 = scalar_select 0, %s6, %s4
  $region1: #{block_forward.1} parent=0
    #allocation2 [shape = 'u8[16384]{0}', space=vmem, size = 0x4000, scoped, tag = 'input window, operand 0, single buffered']
    #allocation3 [shape = 's32[1]{0}', space=sflag, size = 0x4, scoped, tag = 'scoped memory for block_forward.1']
    #allocation4 [shape = 's32[1]{0}', space=sflag, size = 0x4, scoped, tag = 'scoped memory for block_forward.1']
    #allocation5 [shape = 'u8[32768]{0}', space=vmem, size = 0x8000, scoped, tag = 'input window, operand 1, single buffered']
    #allocation6 [shape = 's32[1]{0}', space=sflag, size = 0x4, scoped, tag = 'scoped memory for block_forward.1']
    #allocation7 [shape = 'u8[151552]{0}', space=vmem, size = 0x25000, scoped, tag = 'input window, operand 2, single buffered']
    #allocation8 [shape = 'u8[16384]{0}', space=vmem, size = 0x4000, scoped, tag = 'output window, operand 0, single buffered']
    %8 = vsyncpa [#allocation3], 0
    %9 = vsyncpa [#allocation6], 0
    %10 = vsyncpa [#allocation4], 0
    // Predicated region
    $region2: #{block_forward.1} parent=1 // pred_check
      _
    $region3: #{block_forward.1} parent=1 // pred_check_branch
      %12 = sbr.rel (0) target = $region5
    $region4: #{block_forward.1} parent=1 // pred_region
      %14 = vsyncadd [#allocation3], 0
      %s15 = sshll.u32 %s0, 4
      %s16 = int_to_ptr.hbm [resolvable:$true] %s15
      %s17 = sshll.u32 [#allocation2], 4
      %s18 = int_to_ptr.vmem [resolvable:$true] %s17
      %23 = dma.hbm_to_vmem [thread:$0]  %s16, 512, %s18, [#allocation3], 128, 128, 8
    $region5: #{block_forward.1} parent=1 // pred_fallthru
      _
    // Predicated region
    $region6: #{block_forward.1} parent=1 // pred_check
      _
    $region7: #{block_forward.1} parent=1 // pred_check_branch
      %25 = sbr.rel (0) target = $region9
    $region8: #{block_forward.1} parent=1 // pred_region
      %27 = vsyncadd [#allocation6], 0
      %s28 = sshll.u32 %s1, 4
      %s29 = int_to_ptr.hbm [resolvable:$true] %s28
      %s30 = sshll.u32 [#allocation5], 4
      %s31 = int_to_ptr.vmem [resolvable:$true] %s30
      %36 = dma.hbm_to_vmem [thread:$0]  %s29, 1024, %s31, [#allocation6], 64, 64, 4
    $region9: #{block_forward.1} parent=1 // pred_fallthru
      _
    // Predicated region
    $region10: #{block_forward.1} parent=1 // pred_check
      _
    $region11: #{block_forward.1} parent=1 // pred_check_branch
      %38 = sbr.rel (0) target = $region13
    $region12: #{block_forward.1} parent=1 // pred_region
      %40 = vsyncadd [#allocation6], 0
      %s41 = sshll.u32 %s2, 4
      %s42 = int_to_ptr.hbm [resolvable:$true] %s41
      %s43 = sshll.u32 [#allocation7], 4
      %s44 = int_to_ptr.vmem [resolvable:$true] %s43
      %49 = dma.hbm_to_vmem [thread:$0]  %s42, 4736, %s44, [#allocation6], 128, 128, 8
    $region13: #{block_forward.1} parent=1 // pred_fallthru
      _
    // Predicated region
    $region14: #{block_forward.1} parent=1 // pred_check
      _
    $region15: #{block_forward.1} parent=1 // pred_check_branch
      %51 = sbr.rel (0) target = $region17
    $region16: #{block_forward.1} parent=1 // pred_region
      %53 = dma.done [#allocation3], 512
    $region17: #{block_forward.1} parent=1 // pred_fallthru
      _
    // Predicated region
    $region18: #{block_forward.1} parent=1 // pred_check
      _
    $region19: #{block_forward.1} parent=1 // pred_check_branch
      %55 = sbr.rel (0) target = $region21
    $region20: #{block_forward.1} parent=1 // pred_region
      %57 = dma.done [#allocation6], 1024
    $region21: #{block_forward.1} parent=1 // pred_fallthru
      _
    // Predicated region
    $region22: #{block_forward.1} parent=1 // pred_check
      _
    $region23: #{block_forward.1} parent=1 // pred_check_branch
      %59 = sbr.rel (0) target = $region25
    $region24: #{block_forward.1} parent=1 // pred_region
      %61 = dma.done [#allocation6], 4736
    $region25: #{block_forward.1} parent=1 // pred_fallthru
      _
    %v63 = vld [vmem:[#allocation2] sm:$0xff]
    %v64 = vld [vmem:[#allocation2 + $0x8] sm:$0xff]
    %v65 = vld [vmem:[#allocation2 + $0x10] sm:$0xff]
    %v66 = vld [vmem:[#allocation2 + $0x18] sm:$0xff]
    %v67 = vld [vmem:[#allocation5] sm:$0xf]
    %v68 = vld [vmem:[#allocation5 + $0x4] sm:$0xf]
    %v69 = vld [vmem:[#allocation5 + $0x8] sm:$0xf]
    %v70 = vld [vmem:[#allocation5 + $0xc] sm:$0xf]
    %v71 = vld [vmem:[#allocation5 + $0x10] sm:$0xf]
    %v72 = vld [vmem:[#allocation5 + $0x14] sm:$0xf]
    %v73 = vld [vmem:[#allocation5 + $0x18] sm:$0xf]
    %v74 = vld [vmem:[#allocation5 + $0x1c] sm:$0xf]
    %v75 = vld [vmem:[#allocation5 + $0x20] sm:$0xf]
    %v76 = vld [vmem:[#allocation5 + $0x24] sm:$0xf]
    %v77 = vld [vmem:[#allocation5 + $0x28] sm:$0xf]
    %v78 = vld [vmem:[#allocation5 + $0x2c] sm:$0xf]
    %v79 = vld [vmem:[#allocation5 + $0x30] sm:$0xf]
    %v80 = vld [vmem:[#allocation5 + $0x34] sm:$0xf]
    %v81 = vld [vmem:[#allocation5 + $0x38] sm:$0xf]
    %v82 = vld [vmem:[#allocation5 + $0x3c] sm:$0xf]
    %v83 = vld [vmem:[#allocation7] sm:$0x1]
    %v84 = vld [vmem:[#allocation7 + $0x1] sm:$0x1]
    %v85 = vld [vmem:[#allocation7 + $0x2] sm:$0x1]
    %v86 = vld [vmem:[#allocation7 + $0x3] sm:$0x1]
    %v87 = vld [vmem:[#allocation7 + $0x8] sm:$0xff]
    %v88 = vld [vmem:[#allocation7 + $0x10] sm:$0xff]
    %v89 = vld [vmem:[#allocation7 + $0x18] sm:$0xff]
    %v90 = vld [vmem:[#allocation7 + $0x20] sm:$0xff]
    %v91 = vld [vmem:[#allocation7 + $0x28] sm:$0xff]
    %v92 = vld [vmem:[#allocation7 + $0x30] sm:$0xff]
    %v93 = vld [vmem:[#allocation7 + $0x38] sm:$0xff]
    %v94 = vld [vmem:[#allocation7 + $0x40] sm:$0xff]
    %v95 = vld [vmem:[#allocation7 + $0x48] sm:$0xff]
    %v96 = vld [vmem:[#allocation7 + $0x50] sm:$0xff]
    %v97 = vld [vmem:[#allocation7 + $0x58] sm:$0xff]
    %v98 = vld [vmem:[#allocation7 + $0x60] sm:$0xff]
    %v99 = vld [vmem:[#allocation7 + $0x68] sm:$0xff]
    %v100 = vld [vmem:[#allocation7 + $0x70] sm:$0xff]
    %v101 = vld [vmem:[#allocation7 + $0x78] sm:$0xff]
    %v102 = vld [vmem:[#allocation7 + $0x80] sm:$0xff]
    %v103 = vld [vmem:[#allocation7 + $0x88] sm:$0xff]
    %v104 = vld [vmem:[#allocation7 + $0x90] sm:$0xff]
    %v105 = vld [vmem:[#allocation7 + $0x98] sm:$0xff]
    %v106 = vld [vmem:[#allocation7 + $0xa0] sm:$0xff]
    %v107 = vld [vmem:[#allocation7 + $0xa8] sm:$0xff]
    %v108 = vld [vmem:[#allocation7 + $0xb0] sm:$0xff]
    %v109 = vld [vmem:[#allocation7 + $0xb8] sm:$0xff]
    %v110 = vld [vmem:[#allocation7 + $0xc0] sm:$0xff]
    %v111 = vld [vmem:[#allocation7 + $0xc8] sm:$0xff]
    %v112 = vld [vmem:[#allocation7 + $0xd0] sm:$0xff]
    %v113 = vld [vmem:[#allocation7 + $0xd8] sm:$0xff]
    %v114 = vld [vmem:[#allocation7 + $0xe0] sm:$0xff]
    %v115 = vld [vmem:[#allocation7 + $0xe8] sm:$0xff]
    %v116 = vld [vmem:[#allocation7 + $0xf0] sm:$0xff]
    %v117 = vld [vmem:[#allocation7 + $0xf8] sm:$0xff]
    %v118 = vld [vmem:[#allocation7 + $0x100] sm:$0xff]
    %v119 = vld [vmem:[#allocation7 + $0x108] sm:$0xff]
    %v120 = vld [vmem:[#allocation7 + $0x110] sm:$0xff]
    %v121 = vld [vmem:[#allocation7 + $0x118] sm:$0xff]
    %v122 = vld [vmem:[#allocation7 + $0x120] sm:$0xff]
    %vm123 = vcmask 261120
    %v124 = vsel %vm123, %v63, 0.0
    %125 = vadd.xlane.f32.xlu0 %v124
    %v126 = vpop.xlane.xlu0 %125
    %v127 = vsel %vm123, %v64, 0.0
    %128 = vadd.xlane.f32.xlu0 %v127
    %v129 = vpop.xlane.xlu0 %128
    %v130 = vsel %vm123, %v65, 0.0
    %131 = vadd.xlane.f32.xlu0 %v130
    %v132 = vpop.xlane.xlu0 %131
    %v133 = vsel %vm123, %v66, 0.0
    %134 = vadd.xlane.f32.xlu0 %v133
    %v135 = vpop.xlane.xlu0 %134
    %v136 = vrcp.pop 32.0
    %v137 = vmul.f32 32.0, %v136
    %v138 = vsub.f32 1.0, %v137
    %v139 = vmul.f32 %v136, %v138
    %v140 = vadd.f32 %v136, %v139
    %vm141 = vweird.f32 %v136
    %v142 = vsel %vm141, %v136, %v140
    %v143 = vmul.f32 %v126, %v142
    %v144 = vmul.f32 %v129, %v142
    %v145 = vmul.f32 %v132, %v142
    %v146 = vmul.f32 %v135, %v142
    %v147 = vsub.f32 %v63, %v143
    %v148 = vsub.f32 %v64, %v144
    %v149 = vsub.f32 %v65, %v145
    %v150 = vsub.f32 %v66, %v146
    %v151 = vmul.f32 %v147, %v147
    %v152 = vmul.f32 %v148, %v148
    %v153 = vmul.f32 %v149, %v149
    %v154 = vmul.f32 %v150, %v150
    %v155 = vsel %vm123, %v151, 0.0
    %156 = vadd.xlane.f32.xlu0 %v155
    %v157 = vpop.xlane.xlu0 %156
    %v158 = vsel %vm123, %v152, 0.0
    %159 = vadd.xlane.f32.xlu0 %v158
    %v160 = vpop.xlane.xlu0 %159
    %v161 = vsel %vm123, %v153, 0.0
    %162 = vadd.xlane.f32.xlu0 %v161
    %v163 = vpop.xlane.xlu0 %162
    %v164 = vsel %vm123, %v154, 0.0
    %165 = vadd.xlane.f32.xlu0 %v164
    %v166 = vpop.xlane.xlu0 %165
    %v167 = vmul.f32 %v157, %v142
    %v168 = vmul.f32 %v160, %v142
    %v169 = vmul.f32 %v163, %v142
    %v170 = vmul.f32 %v166, %v142
    %v171 = vadd.f32 %v167, 1e-06
    %v172 = vadd.f32 %v168, 1e-06
    %v173 = vadd.f32 %v169, 1e-06
    %v174 = vadd.f32 %v170, 1e-06
    %v175 = vrsqrt.pop %v171
    %v176 = vmul.f32 %v175, %v171
    %v177 = vmul.f32 %v176, %v175
    %v178 = vmul.f32 0.5, %v177
    %v179 = vsub.f32 1.5, %v178
    %v180 = vmul.f32 %v175, %v179
    %vm181 = vweird.f32 %v171
    %vm182 = vweird.f32 %v175
    %vm183 = vmor %vm181, %vm182
    %v184 = vsel %vm183, %v175, %v180
    %v185 = vrsqrt.pop %v172
    %v186 = vmul.f32 %v185, %v172
    %v187 = vmul.f32 %v186, %v185
    %v188 = vmul.f32 0.5, %v187
    %v189 = vsub.f32 1.5, %v188
    %v190 = vmul.f32 %v185, %v189
    %vm191 = vweird.f32 %v172
    %vm192 = vweird.f32 %v185
    %vm193 = vmor %vm191, %vm192
    %v194 = vsel %vm193, %v185, %v190
    %v195 = vrsqrt.pop %v173
    %v196 = vmul.f32 %v195, %v173
    %v197 = vmul.f32 %v196, %v195
    %v198 = vmul.f32 0.5, %v197
    %v199 = vsub.f32 1.5, %v198
    %v200 = vmul.f32 %v195, %v199
    %vm201 = vweird.f32 %v173
    %vm202 = vweird.f32 %v195
    %vm203 = vmor %vm201, %vm202
    %v204 = vsel %vm203, %v195, %v200
    %v205 = vrsqrt.pop %v174
    %v206 = vmul.f32 %v205, %v174
    %v207 = vmul.f32 %v206, %v205
    %v208 = vmul.f32 0.5, %v207
    %v209 = vsub.f32 1.5, %v208
    %v210 = vmul.f32 %v205, %v209
    %vm211 = vweird.f32 %v174
    %vm212 = vweird.f32 %v205
    %vm213 = vmor %vm211, %vm212
    %v214 = vsel %vm213, %v205, %v210
    %v215 = vmul.f32 %v147, %v184
    %v216 = vmul.f32 %v148, %v194
    %v217 = vmul.f32 %v149, %v204
    %v218 = vmul.f32 %v150, %v214
    %v219 = vpack.c.bf16 %v216, %v215
    %v220 = vpack.c.bf16 %v218, %v217
    %v221 = vperm.slane %v83, 0
    %v226 = vunpack.c.l.b16 %v67
    %v227 = vunpack.c.l.b16 %v68
    %v228 = vunpack.c.l.b16 %v69
    %v229 = vunpack.c.l.b16 %v70
    %v230 = vpack.c.b16 %v227, %v226
    %v231 = vpack.c.b16 %v229, %v228
    %v235 = vsel %vm123, %v219, 0
    %v238 = vsel %vm123, %v220, 0
    %240 = vmatpush.bf16.msra.mxu0 0
    %241 = vmatpush.bf16.msra.mxu0 0
    %242 = vmatpush.bf16.msra.mxu0 0
    %243 = vmatpush.bf16.msra.mxu0 0
    %244 = vmatpush.bf16.msra.mxu0 0
    %245 = vmatpush.bf16.msra.mxu0 0
    %246 = vmatpush.bf16.msra.mxu0 %v231
    %247 = vmatpush.bf16.msra.mxu0 %v230
    %248 = vmatmul.bf16.gmra.mxu0 %v235
    %v249 = vpop.f32.mrf.mxu0
    %v250 = vadd.f32 %v221, %v249
    %v251 = vpop.f32.mrf.mxu0
    %v252 = vadd.f32 %v221, %v251
    %253 = vmatmul.bf16.gmra.mxu0 %v238
    %v254 = vpop.f32.mrf.mxu0
    %v255 = vadd.f32 %v221, %v254
    %v256 = vpop.f32.mrf.mxu0
    %v257 = vadd.f32 %v221, %v256
    %258 = vdwg.mxu0
    %275 = vrot.lane.b32.xlu0 %v91, 32
    %v276 = vpop.permute.xlu0 %275
    %277 = vrot.lane.b32.xlu0 %v92, 32
    %v278 = vpop.permute.xlu0 %277
    %279 = vrot.lane.b32.xlu0 %v93, 32
    %v280 = vpop.permute.xlu0 %279
    %281 = vrot.lane.b32.xlu0 %v94, 32
    %v282 = vpop.permute.xlu0 %281
    %283 = vrot.lane.b32.xlu0 %v95, 32
    %v284 = vpop.permute.xlu0 %283
    %285 = vrot.lane.b32.xlu0 %v96, 32
    %v286 = vpop.permute.xlu0 %285
    %287 = vrot.lane.b32.xlu0 %v97, 32
    %v288 = vpop.permute.xlu0 %287
    %289 = vrot.lane.b32.xlu0 %v98, 32
    %v290 = vpop.permute.xlu0 %289
    %291 = vrot.lane.b32.xlu0 %v99, 32
    %v292 = vpop.permute.xlu0 %291
    %293 = vrot.lane.b32.xlu0 %v100, 32
    %v294 = vpop.permute.xlu0 %293
    %295 = vrot.lane.b32.xlu0 %v101, 32
    %v296 = vpop.permute.xlu0 %295
    %297 = vrot.lane.b32.xlu0 %v102, 32
    %v298 = vpop.permute.xlu0 %297
    %299 = vrot.lane.b32.xlu0 %v103, 32
    %v300 = vpop.permute.xlu0 %299
    %301 = vrot.lane.b32.xlu0 %v104, 32
    %v302 = vpop.permute.xlu0 %301
    %303 = vrot.lane.b32.xlu0 %v105, 32
    %v304 = vpop.permute.xlu0 %303
    %305 = vrot.lane.b32.xlu0 %v106, 32
    %v306 = vpop.permute.xlu0 %305
    %v323 = vmul.f32 %v250, %v276
    %v324 = vmul.f32 %v252, %v278
    %v325 = vmul.f32 %v255, %v280
    %v326 = vmul.f32 %v257, %v282
    %v327 = vmul.f32 %v250, %v284
    %v328 = vmul.f32 %v252, %v286
    %v329 = vmul.f32 %v255, %v288
    %v330 = vmul.f32 %v257, %v290
    %v331 = vmul.f32 %v250, %v292
    %v332 = vmul.f32 %v252, %v294
    %v333 = vmul.f32 %v255, %v296
    %v334 = vmul.f32 %v257, %v298
    %v335 = vmul.f32 %v250, %v300
    %v336 = vmul.f32 %v252, %v302
    %v337 = vmul.f32 %v255, %v304
    %v338 = vmul.f32 %v257, %v306
    %339 = vrot.lane.b32.xlu0 %v91, 64
    %v340 = vpop.permute.xlu0 %339
    %341 = vrot.lane.b32.xlu0 %v92, 64
    %v342 = vpop.permute.xlu0 %341
    %343 = vrot.lane.b32.xlu0 %v93, 64
    %v344 = vpop.permute.xlu0 %343
    %345 = vrot.lane.b32.xlu0 %v94, 64
    %v346 = vpop.permute.xlu0 %345
    %347 = vrot.lane.b32.xlu0 %v95, 64
    %v348 = vpop.permute.xlu0 %347
    %349 = vrot.lane.b32.xlu0 %v96, 64
    %v350 = vpop.permute.xlu0 %349
    %351 = vrot.lane.b32.xlu0 %v97, 64
    %v352 = vpop.permute.xlu0 %351
    %353 = vrot.lane.b32.xlu0 %v98, 64
    %v354 = vpop.permute.xlu0 %353
    %355 = vrot.lane.b32.xlu0 %v99, 64
    %v356 = vpop.permute.xlu0 %355
    %357 = vrot.lane.b32.xlu0 %v100, 64
    %v358 = vpop.permute.xlu0 %357
    %359 = vrot.lane.b32.xlu0 %v101, 64
    %v360 = vpop.permute.xlu0 %359
    %361 = vrot.lane.b32.xlu0 %v102, 64
    %v362 = vpop.permute.xlu0 %361
    %363 = vrot.lane.b32.xlu0 %v103, 64
    %v364 = vpop.permute.xlu0 %363
    %365 = vrot.lane.b32.xlu0 %v104, 64
    %v366 = vpop.permute.xlu0 %365
    %367 = vrot.lane.b32.xlu0 %v105, 64
    %v368 = vpop.permute.xlu0 %367
    %369 = vrot.lane.b32.xlu0 %v106, 64
    %v370 = vpop.permute.xlu0 %369
    %v387 = vmul.f32 %v250, %v340
    %v388 = vmul.f32 %v252, %v342
    %v389 = vmul.f32 %v255, %v344
    %v390 = vmul.f32 %v257, %v346
    %v391 = vmul.f32 %v250, %v348
    %v392 = vmul.f32 %v252, %v350
    %v393 = vmul.f32 %v255, %v352
    %v394 = vmul.f32 %v257, %v354
    %v395 = vmul.f32 %v250, %v356
    %v396 = vmul.f32 %v252, %v358
    %v397 = vmul.f32 %v255, %v360
    %v398 = vmul.f32 %v257, %v362
    %v399 = vmul.f32 %v250, %v364
    %v400 = vmul.f32 %v252, %v366
    %v401 = vmul.f32 %v255, %v368
    %v402 = vmul.f32 %v257, %v370
    %v403 = vpack.c.bf16 %v252, %v250
    %v404 = vpack.c.bf16 %v257, %v255
    %v405 = vpack.c.bf16 %v324, %v323
    %v406 = vpack.c.bf16 %v326, %v325
    %v407 = vpack.c.bf16 %v328, %v327
    %v408 = vpack.c.bf16 %v330, %v329
    %v409 = vpack.c.bf16 %v332, %v331
    %v410 = vpack.c.bf16 %v334, %v333
    %v411 = vpack.c.bf16 %v336, %v335
    %v412 = vpack.c.bf16 %v338, %v337
    %421 = vrot.lane.b32.xlu0 %v405, 96
    %v422 = vpop.permute.xlu0 %421
    %423 = vrot.lane.b32.xlu0 %v406, 96
    %v424 = vpop.permute.xlu0 %423
    %425 = vrot.lane.b32.xlu0 %v407, 96
    %v426 = vpop.permute.xlu0 %425
    %427 = vrot.lane.b32.xlu0 %v408, 96
    %v428 = vpop.permute.xlu0 %427
    %429 = vrot.lane.b32.xlu0 %v409, 96
    %v430 = vpop.permute.xlu0 %429
    %431 = vrot.lane.b32.xlu0 %v410, 96
    %v432 = vpop.permute.xlu0 %431
    %433 = vrot.lane.b32.xlu0 %v411, 96
    %v434 = vpop.permute.xlu0 %433
    %435 = vrot.lane.b32.xlu0 %v412, 96
    %v436 = vpop.permute.xlu0 %435
    %v438 = vsel %vm123, %v403, 0
    %v441 = vsel %vm123, %v404, 0
    %v444 = vsel %vm123, %v422, 0
    %v447 = vsel %vm123, %v424, 0
    %v450 = vsel %vm123, %v426, 0
    %v453 = vsel %vm123, %v428, 0
    %v456 = vsel %vm123, %v430, 0
    %v459 = vsel %vm123, %v432, 0
    %v462 = vsel %vm123, %v434, 0
    %v465 = vsel %vm123, %v436, 0
    %467 = vmatpush.bf16.xpose.msra.mxu0 %v465
    %468 = vmatpush.bf16.xpose.msra.mxu0 %v462
    %469 = vmatpush.bf16.xpose.msra.mxu0 %v459
    %470 = vmatpush.bf16.xpose.msra.mxu0 %v456
    %471 = vmatpush.bf16.xpose.msra.mxu0 %v453
    %472 = vmatpush.bf16.xpose.msra.mxu0 %v450
    %473 = vmatpush.bf16.xpose.msra.mxu0 %v447
    %474 = vmatpush.bf16.xpose.msra.mxu0 %v444
    %475 = vmatmul.bf16.gmra.mxu0 %v438
    %v476 = vpop.f32.mrf.mxu0
    %v477 = vadd.f32 %v87, %v476
    %v478 = vpop.f32.mrf.mxu0
    %v479 = vadd.f32 %v88, %v478
    %480 = vmatmul.bf16.gmra.mxu0 %v441
    %v481 = vpop.f32.mrf.mxu0
    %v482 = vadd.f32 %v89, %v481
    %v483 = vpop.f32.mrf.mxu0
    %v484 = vadd.f32 %v90, %v483
    %485 = vdwg.mxu0
    %486 = vmax.xlane.f32.xlu0 %v477
    %v487 = vpop.xlane.xlu0 %486
    %488 = vmax.xlane.f32.xlu0 %v479
    %v489 = vpop.xlane.xlu0 %488
    %490 = vmax.xlane.f32.xlu0 %v482
    %v491 = vpop.xlane.xlu0 %490
    %492 = vmax.xlane.f32.xlu0 %v484
    %v493 = vpop.xlane.xlu0 %492
    %v494 = vsub.f32 %v477, %v487
    %v495 = vsub.f32 %v479, %v489
    %v496 = vsub.f32 %v482, %v491
    %v497 = vsub.f32 %v484, %v493
    %v498 = vmul.f32 %v494, 1.442695
    %v499 = vpow.pop %v498
    %v500 = vmul.f32 %v495, 1.442695
    %v501 = vpow.pop %v500
    %v502 = vmul.f32 %v496, 1.442695
    %v503 = vpow.pop %v502
    %v504 = vmul.f32 %v497, 1.442695
    %v505 = vpow.pop %v504
    %506 = vmatpush.msra.mxu0 %v122
    %507 = vmatpush.msra.mxu0 %v121
    %508 = vmatpush.msra.mxu0 %v120
    %509 = vmatpush.msra.mxu0 %v119
    %510 = vmatpush.msra.mxu0 %v118
    %511 = vmatpush.msra.mxu0 %v117
    %512 = vmatpush.msra.mxu0 %v116
    %513 = vmatpush.msra.mxu0 %v115
    %514 = vmatpush.msra.mxu0 %v114
    %515 = vmatpush.msra.mxu0 %v113
    %516 = vmatpush.msra.mxu0 %v112
    %517 = vmatpush.msra.mxu0 %v111
    %518 = vmatpush.msra.mxu0 %v110
    %519 = vmatpush.msra.mxu0 %v109
    %520 = vmatpush.msra.mxu0 %v108
    %521 = vmatpush.msra.mxu0 %v107
    %522 = vmatmul.f32.gmra.mxu0 %v499
    %v523 = vpop.f32.mrf.mxu0
    %v524 = vadd.f32 0.0, %v523
    %525 = vmatmul.f32.gmra.mxu0 %v501
    %v526 = vpop.f32.mrf.mxu0
    %v527 = vadd.f32 0.0, %v526
    %528 = vmatmul.f32.gmra.mxu0 %v503
    %v529 = vpop.f32.mrf.mxu0
    %v530 = vadd.f32 0.0, %v529
    %531 = vmatmul.f32.gmra.mxu0 %v505
    %v532 = vpop.f32.mrf.mxu0
    %v533 = vadd.f32 0.0, %v532
    %534 = vdwg.mxu0
    %v535 = vrcp.pop %v524
    %v536 = vrcp.pop %v527
    %v537 = vrcp.pop %v530
    %v538 = vrcp.pop %v533
    %v539 = vmul.f32 %v499, %v535
    %v540 = vmul.f32 %v501, %v536
    %v541 = vmul.f32 %v503, %v537
    %v542 = vmul.f32 %v505, %v538
    %v543 = vpack.c.bf16 %v388, %v387
    %v544 = vpack.c.bf16 %v390, %v389
    %v545 = vpack.c.bf16 %v392, %v391
    %v546 = vpack.c.bf16 %v394, %v393
    %v547 = vpack.c.bf16 %v396, %v395
    %v548 = vpack.c.bf16 %v398, %v397
    %v549 = vpack.c.bf16 %v400, %v399
    %v550 = vpack.c.bf16 %v402, %v401
    %559 = vrot.lane.b32.xlu0 %v543, 64
    %v560 = vpop.permute.xlu0 %559
    %561 = vrot.lane.b32.xlu0 %v544, 64
    %v562 = vpop.permute.xlu0 %561
    %563 = vrot.lane.b32.xlu0 %v545, 64
    %v564 = vpop.permute.xlu0 %563
    %565 = vrot.lane.b32.xlu0 %v546, 64
    %v566 = vpop.permute.xlu0 %565
    %567 = vrot.lane.b32.xlu0 %v547, 64
    %v568 = vpop.permute.xlu0 %567
    %569 = vrot.lane.b32.xlu0 %v548, 64
    %v570 = vpop.permute.xlu0 %569
    %571 = vrot.lane.b32.xlu0 %v549, 64
    %v572 = vpop.permute.xlu0 %571
    %573 = vrot.lane.b32.xlu0 %v550, 64
    %v574 = vpop.permute.xlu0 %573
    %v579 = vunpack.c.l.b16 %v79
    %v580 = vunpack.c.l.b16 %v80
    %v581 = vunpack.c.l.b16 %v81
    %v582 = vunpack.c.l.b16 %v82
    %v583 = vpack.c.b16 %v580, %v579
    %v584 = vpack.c.b16 %v582, %v581
    %v588 = vsel %vm123, %v560, 0
    %v591 = vsel %vm123, %v562, 0
    %v594 = vsel %vm123, %v564, 0
    %v597 = vsel %vm123, %v566, 0
    %v600 = vsel %vm123, %v568, 0
    %v603 = vsel %vm123, %v570, 0
    %v606 = vsel %vm123, %v572, 0
    %v609 = vsel %vm123, %v574, 0
    %611 = vmatpush.bf16.msra.mxu0 0
    %612 = vmatpush.bf16.msra.mxu0 0
    %613 = vmatpush.bf16.msra.mxu0 0
    %614 = vmatpush.bf16.msra.mxu0 0
    %615 = vmatpush.bf16.msra.mxu0 0
    %616 = vmatpush.bf16.msra.mxu0 0
    %617 = vmatpush.bf16.msra.mxu0 %v584
    %618 = vmatpush.bf16.msra.mxu0 %v583
    %619 = vmatmul.bf16.gmra.mxu0 %v588
    %v620 = vpop.f32.mrf.mxu0
    %v621 = vadd.f32 0.0, %v620
    %v622 = vpop.f32.mrf.mxu0
    %v623 = vadd.f32 0.0, %v622
    %624 = vmatmul.bf16.gmra.mxu0 %v591
    %v625 = vpop.f32.mrf.mxu0
    %v626 = vadd.f32 0.0, %v625
    %v627 = vpop.f32.mrf.mxu0
    %v628 = vadd.f32 0.0, %v627
    %629 = vmatmul.bf16.gmra.mxu0 %v594
    %v630 = vpop.f32.mrf.mxu0
    %v631 = vadd.f32 0.0, %v630
    %v632 = vpop.f32.mrf.mxu0
    %v633 = vadd.f32 0.0, %v632
    %634 = vmatmul.bf16.gmra.mxu0 %v597
    %v635 = vpop.f32.mrf.mxu0
    %v636 = vadd.f32 0.0, %v635
    %v637 = vpop.f32.mrf.mxu0
    %v638 = vadd.f32 0.0, %v637
    %639 = vmatmul.bf16.gmra.mxu0 %v600
    %v640 = vpop.f32.mrf.mxu0
    %v641 = vadd.f32 0.0, %v640
    %v642 = vpop.f32.mrf.mxu0
    %v643 = vadd.f32 0.0, %v642
    %644 = vmatmul.bf16.gmra.mxu0 %v603
    %v645 = vpop.f32.mrf.mxu0
    %v646 = vadd.f32 0.0, %v645
    %v647 = vpop.f32.mrf.mxu0
    %v648 = vadd.f32 0.0, %v647
    %649 = vmatmul.bf16.gmra.mxu0 %v606
    %v650 = vpop.f32.mrf.mxu0
    %v651 = vadd.f32 0.0, %v650
    %v652 = vpop.f32.mrf.mxu0
    %v653 = vadd.f32 0.0, %v652
    %654 = vmatmul.bf16.gmra.mxu0 %v609
    %v655 = vpop.f32.mrf.mxu0
    %v656 = vadd.f32 0.0, %v655
    %v657 = vpop.f32.mrf.mxu0
    %v658 = vadd.f32 0.0, %v657
    %659 = vdwg.mxu0
    %v660 = vpack.c.bf16 %v540, %v539
    %v661 = vpack.c.bf16 %v542, %v541
    %v662 = vpack.c.bf16 %v623, %v621
    %v663 = vpack.c.bf16 %v628, %v626
    %v664 = vpack.c.bf16 %v633, %v631
    %v665 = vpack.c.bf16 %v638, %v636
    %v666 = vpack.c.bf16 %v643, %v641
    %v667 = vpack.c.bf16 %v648, %v646
    %v668 = vpack.c.bf16 %v653, %v651
    %v669 = vpack.c.bf16 %v658, %v656
    %v670 = vperm.slane %v85, 0
    %671 = vmatpush.bf16.msra.mxu0 %v669
    %672 = vmatpush.bf16.msra.mxu0 %v668
    %673 = vmatpush.bf16.msra.mxu0 %v667
    %674 = vmatpush.bf16.msra.mxu0 %v666
    %675 = vmatpush.bf16.msra.mxu0 %v665
    %676 = vmatpush.bf16.msra.mxu0 %v664
    %677 = vmatpush.bf16.msra.mxu0 %v663
    %678 = vmatpush.bf16.msra.mxu0 %v662
    %679 = vmatmul.bf16.gmra.mxu0 %v660
    %v680 = vpop.f32.mrf.mxu0
    %v681 = vadd.f32 %v670, %v680
    %v682 = vpop.f32.mrf.mxu0
    %v683 = vadd.f32 %v670, %v682
    %684 = vmatmul.bf16.gmra.mxu0 %v661
    %v685 = vpop.f32.mrf.mxu0
    %v686 = vadd.f32 %v670, %v685
    %v687 = vpop.f32.mrf.mxu0
    %v688 = vadd.f32 %v670, %v687
    %689 = vdwg.mxu0
    %v690 = vadd.f32 %v63, %v681
    %v691 = vadd.f32 %v64, %v683
    %v692 = vadd.f32 %v65, %v686
    %v693 = vadd.f32 %v66, %v688
    %v694 = vsel %vm123, %v690, 0.0
    %695 = vadd.xlane.f32.xlu0 %v694
    %v696 = vpop.xlane.xlu0 %695
    %v697 = vsel %vm123, %v691, 0.0
    %698 = vadd.xlane.f32.xlu0 %v697
    %v699 = vpop.xlane.xlu0 %698
    %v700 = vsel %vm123, %v692, 0.0
    %701 = vadd.xlane.f32.xlu0 %v700
    %v702 = vpop.xlane.xlu0 %701
    %v703 = vsel %vm123, %v693, 0.0
    %704 = vadd.xlane.f32.xlu0 %v703
    %v705 = vpop.xlane.xlu0 %704
    %v706 = vmul.f32 %v696, %v142
    %v707 = vmul.f32 %v699, %v142
    %v708 = vmul.f32 %v702, %v142
    %v709 = vmul.f32 %v705, %v142
    %v710 = vsub.f32 %v690, %v706
    %v711 = vsub.f32 %v691, %v707
    %v712 = vsub.f32 %v692, %v708
    %v713 = vsub.f32 %v693, %v709
    %v714 = vmul.f32 %v710, %v710
    %v715 = vmul.f32 %v711, %v711
    %v716 = vmul.f32 %v712, %v712
    %v717 = vmul.f32 %v713, %v713
    %v718 = vsel %vm123, %v714, 0.0
    %719 = vadd.xlane.f32.xlu0 %v718
    %v720 = vpop.xlane.xlu0 %719
    %v721 = vsel %vm123, %v715, 0.0
    %722 = vadd.xlane.f32.xlu0 %v721
    %v723 = vpop.xlane.xlu0 %722
    %v724 = vsel %vm123, %v716, 0.0
    %725 = vadd.xlane.f32.xlu0 %v724
    %v726 = vpop.xlane.xlu0 %725
    %v727 = vsel %vm123, %v717, 0.0
    %728 = vadd.xlane.f32.xlu0 %v727
    %v729 = vpop.xlane.xlu0 %728
    %v730 = vmul.f32 %v720, %v142
    %v731 = vmul.f32 %v723, %v142
    %v732 = vmul.f32 %v726, %v142
    %v733 = vmul.f32 %v729, %v142
    %v734 = vadd.f32 %v730, 1e-06
    %v735 = vadd.f32 %v731, 1e-06
    %v736 = vadd.f32 %v732, 1e-06
    %v737 = vadd.f32 %v733, 1e-06
    %v738 = vrsqrt.pop %v734
    %v739 = vmul.f32 %v738, %v734
    %v740 = vmul.f32 %v739, %v738
    %v741 = vmul.f32 0.5, %v740
    %v742 = vsub.f32 1.5, %v741
    %v743 = vmul.f32 %v738, %v742
    %vm744 = vweird.f32 %v734
    %vm745 = vweird.f32 %v738
    %vm746 = vmor %vm744, %vm745
    %v747 = vsel %vm746, %v738, %v743
    %v748 = vrsqrt.pop %v735
    %v749 = vmul.f32 %v748, %v735
    %v750 = vmul.f32 %v749, %v748
    %v751 = vmul.f32 0.5, %v750
    %v752 = vsub.f32 1.5, %v751
    %v753 = vmul.f32 %v748, %v752
    %vm754 = vweird.f32 %v735
    %vm755 = vweird.f32 %v748
    %vm756 = vmor %vm754, %vm755
    %v757 = vsel %vm756, %v748, %v753
    %v758 = vrsqrt.pop %v736
    %v759 = vmul.f32 %v758, %v736
    %v760 = vmul.f32 %v759, %v758
    %v761 = vmul.f32 0.5, %v760
    %v762 = vsub.f32 1.5, %v761
    %v763 = vmul.f32 %v758, %v762
    %vm764 = vweird.f32 %v736
    %vm765 = vweird.f32 %v758
    %vm766 = vmor %vm764, %vm765
    %v767 = vsel %vm766, %v758, %v763
    %v768 = vrsqrt.pop %v737
    %v769 = vmul.f32 %v768, %v737
    %v770 = vmul.f32 %v769, %v768
    %v771 = vmul.f32 0.5, %v770
    %v772 = vsub.f32 1.5, %v771
    %v773 = vmul.f32 %v768, %v772
    %vm774 = vweird.f32 %v737
    %vm775 = vweird.f32 %v768
    %vm776 = vmor %vm774, %vm775
    %v777 = vsel %vm776, %v768, %v773
    %v778 = vmul.f32 %v710, %v747
    %v779 = vmul.f32 %v711, %v757
    %v780 = vmul.f32 %v712, %v767
    %v781 = vmul.f32 %v713, %v777
    %v782 = vpack.c.bf16 %v779, %v778
    %v783 = vpack.c.bf16 %v781, %v780
    %v784 = vperm.slane %v84, 0
    %v789 = vunpack.c.l.b16 %v71
    %v790 = vunpack.c.l.b16 %v72
    %v791 = vunpack.c.l.b16 %v73
    %v792 = vunpack.c.l.b16 %v74
    %v793 = vpack.c.b16 %v790, %v789
    %v794 = vpack.c.b16 %v792, %v791
    %v798 = vsel %vm123, %v782, 0
    %v801 = vsel %vm123, %v783, 0
    %803 = vmatpush.bf16.msra.mxu0 0
    %804 = vmatpush.bf16.msra.mxu0 0
    %805 = vmatpush.bf16.msra.mxu0 0
    %806 = vmatpush.bf16.msra.mxu0 0
    %807 = vmatpush.bf16.msra.mxu0 0
    %808 = vmatpush.bf16.msra.mxu0 0
    %809 = vmatpush.bf16.msra.mxu0 %v794
    %810 = vmatpush.bf16.msra.mxu0 %v793
    %811 = vmatmul.bf16.gmra.mxu0 %v798
    %v812 = vpop.f32.mrf.mxu0
    %v813 = vadd.f32 %v784, %v812
    %v814 = vpop.f32.mrf.mxu0
    %v815 = vadd.f32 %v784, %v814
    %816 = vmatmul.bf16.gmra.mxu0 %v801
    %v817 = vpop.f32.mrf.mxu0
    %v818 = vadd.f32 %v784, %v817
    %v819 = vpop.f32.mrf.mxu0
    %v820 = vadd.f32 %v784, %v819
    %821 = vdwg.mxu0
    %v822 = vmul.f32 %v813, 0.5
    %v823 = vmul.f32 %v815, 0.5
    %v824 = vmul.f32 %v818, 0.5
    %v825 = vmul.f32 %v820, 0.5
    %v826 = vmul.f32 %v813, 0.70710677
    %v827 = vmul.f32 %v815, 0.70710677
    %v828 = vmul.f32 %v818, 0.70710677
    %v829 = vmul.f32 %v820, 0.70710677
    %v830 = vmul.f32 %v826, %v826
    %v831 = vmin.f32 16.0, %v830
    %v832 = vmul.f32 %v831, 2.1237322e-06
    %v833 = vadd.f32 %v832, 0.00028619796
    %v834 = vmul.f32 %v831, %v833
    %v835 = vadd.f32 %v834, 0.0036580483
    %v836 = vmul.f32 %v831, %v835
    %v837 = vadd.f32 %v836, 0.05243302
    %v838 = vmul.f32 %v831, %v837
    %v839 = vadd.f32 %v838, 0.18741608
    %v840 = vmul.f32 %v831, %v839
    %v841 = vadd.f32 %v840, 1.1283791
    %v842 = vmul.f32 %v826, %v841
    %v843 = vmul.f32 %v831, 3.8918573e-05
    %v844 = vadd.f32 %v843, 0.001143296
    %v845 = vmul.f32 %v831, %v844
    %v846 = vadd.f32 %v845, 0.014752088
    %v847 = vmul.f32 %v831, %v846
    %v848 = vadd.f32 %v847, 0.112945676
    %v849 = vmul.f32 %v831, %v848
    %v850 = vadd.f32 %v849, 0.4994258
    %v851 = vmul.f32 %v831, %v850
    %v852 = vadd.f32 %v851, 1.0
    %v853 = vrcp.pop %v852
    %v854 = vmul.f32 %v852, %v853
    %v855 = vsub.f32 1.0, %v854
    %v856 = vmul.f32 %v853, %v855
    %v857 = vadd.f32 %v853, %v856
    %vm858 = vweird.f32 %v852
    %vm859 = vweird.f32 %v853
    %vm860 = vmor %vm858, %vm859
    %v861 = vsel %vm860, %v853, %v857
    %v862 = vand.u32 2147483647, %v852
    %vm863 = vcmp.eq.f32.partialorder %v862, 8.507059e+37
    %v864 = vand.u32 %v852, 2147483648
    %v865 = vor.u32 1.1754944e-38, %v864
    %v866 = vsel %vm863, %v865, %v861
    %v867 = vmul.f32 %v842, %v866
    %v868 = vmin.f32 %v867, 1.0
    %v869 = vmax.f32 %v868, -1.0
    %v870 = vmul.f32 %v827, %v827
    %v871 = vmin.f32 16.0, %v870
    %v872 = vmul.f32 %v871, 2.1237322e-06
    %v873 = vadd.f32 %v872, 0.00028619796
    %v874 = vmul.f32 %v871, %v873
    %v875 = vadd.f32 %v874, 0.0036580483
    %v876 = vmul.f32 %v871, %v875
    %v877 = vadd.f32 %v876, 0.05243302
    %v878 = vmul.f32 %v871, %v877
    %v879 = vadd.f32 %v878, 0.18741608
    %v880 = vmul.f32 %v871, %v879
    %v881 = vadd.f32 %v880, 1.1283791
    %v882 = vmul.f32 %v827, %v881
    %v883 = vmul.f32 %v871, 3.8918573e-05
    %v884 = vadd.f32 %v883, 0.001143296
    %v885 = vmul.f32 %v871, %v884
    %v886 = vadd.f32 %v885, 0.014752088
    %v887 = vmul.f32 %v871, %v886
    %v888 = vadd.f32 %v887, 0.112945676
    %v889 = vmul.f32 %v871, %v888
    %v890 = vadd.f32 %v889, 0.4994258
    %v891 = vmul.f32 %v871, %v890
    %v892 = vadd.f32 %v891, 1.0
    %v893 = vrcp.pop %v892
    %v894 = vmul.f32 %v892, %v893
    %v895 = vsub.f32 1.0, %v894
    %v896 = vmul.f32 %v893, %v895
    %v897 = vadd.f32 %v893, %v896
    %vm898 = vweird.f32 %v892
    %vm899 = vweird.f32 %v893
    %vm900 = vmor %vm898, %vm899
    %v901 = vsel %vm900, %v893, %v897
    %v902 = vand.u32 2147483647, %v892
    %vm903 = vcmp.eq.f32.partialorder %v902, 8.507059e+37
    %v904 = vand.u32 %v892, 2147483648
    %v905 = vor.u32 1.1754944e-38, %v904
    %v906 = vsel %vm903, %v905, %v901
    %v907 = vmul.f32 %v882, %v906
    %v908 = vmin.f32 %v907, 1.0
    %v909 = vmax.f32 %v908, -1.0
    %v910 = vmul.f32 %v828, %v828
    %v911 = vmin.f32 16.0, %v910
    %v912 = vmul.f32 %v911, 2.1237322e-06
    %v913 = vadd.f32 %v912, 0.00028619796
    %v914 = vmul.f32 %v911, %v913
    %v915 = vadd.f32 %v914, 0.0036580483
    %v916 = vmul.f32 %v911, %v915
    %v917 = vadd.f32 %v916, 0.05243302
    %v918 = vmul.f32 %v911, %v917
    %v919 = vadd.f32 %v918, 0.18741608
    %v920 = vmul.f32 %v911, %v919
    %v921 = vadd.f32 %v920, 1.1283791
    %v922 = vmul.f32 %v828, %v921
    %v923 = vmul.f32 %v911, 3.8918573e-05
    %v924 = vadd.f32 %v923, 0.001143296
    %v925 = vmul.f32 %v911, %v924
    %v926 = vadd.f32 %v925, 0.014752088
    %v927 = vmul.f32 %v911, %v926
    %v928 = vadd.f32 %v927, 0.112945676
    %v929 = vmul.f32 %v911, %v928
    %v930 = vadd.f32 %v929, 0.4994258
    %v931 = vmul.f32 %v911, %v930
    %v932 = vadd.f32 %v931, 1.0
    %v933 = vrcp.pop %v932
    %v934 = vmul.f32 %v932, %v933
    %v935 = vsub.f32 1.0, %v934
    %v936 = vmul.f32 %v933, %v935
    %v937 = vadd.f32 %v933, %v936
    %vm938 = vweird.f32 %v932
    %vm939 = vweird.f32 %v933
    %vm940 = vmor %vm938, %vm939
    %v941 = vsel %vm940, %v933, %v937
    %v942 = vand.u32 2147483647, %v932
    %vm943 = vcmp.eq.f32.partialorder %v942, 8.507059e+37
    %v944 = vand.u32 %v932, 2147483648
    %v945 = vor.u32 1.1754944e-38, %v944
    %v946 = vsel %vm943, %v945, %v941
    %v947 = vmul.f32 %v922, %v946
    %v948 = vmin.f32 %v947, 1.0
    %v949 = vmax.f32 %v948, -1.0
    %v950 = vmul.f32 %v829, %v829
    %v951 = vmin.f32 16.0, %v950
    %v952 = vmul.f32 %v951, 2.1237322e-06
    %v953 = vadd.f32 %v952, 0.00028619796
    %v954 = vmul.f32 %v951, %v953
    %v955 = vadd.f32 %v954, 0.0036580483
    %v956 = vmul.f32 %v951, %v955
    %v957 = vadd.f32 %v956, 0.05243302
    %v958 = vmul.f32 %v951, %v957
    %v959 = vadd.f32 %v958, 0.18741608
    %v960 = vmul.f32 %v951, %v959
    %v961 = vadd.f32 %v960, 1.1283791
    %v962 = vmul.f32 %v829, %v961
    %v963 = vmul.f32 %v951, 3.8918573e-05
    %v964 = vadd.f32 %v963, 0.001143296
    %v965 = vmul.f32 %v951, %v964
    %v966 = vadd.f32 %v965, 0.014752088
    %v967 = vmul.f32 %v951, %v966
    %v968 = vadd.f32 %v967, 0.112945676
    %v969 = vmul.f32 %v951, %v968
    %v970 = vadd.f32 %v969, 0.4994258
    %v971 = vmul.f32 %v951, %v970
    %v972 = vadd.f32 %v971, 1.0
    %v973 = vrcp.pop %v972
    %v974 = vmul.f32 %v972, %v973
    %v975 = vsub.f32 1.0, %v974
    %v976 = vmul.f32 %v973, %v975
    %v977 = vadd.f32 %v973, %v976
    %vm978 = vweird.f32 %v972
    %vm979 = vweird.f32 %v973
    %vm980 = vmor %vm978, %vm979
    %v981 = vsel %vm980, %v973, %v977
    %v982 = vand.u32 2147483647, %v972
    %vm983 = vcmp.eq.f32.partialorder %v982, 8.507059e+37
    %v984 = vand.u32 %v972, 2147483648
    %v985 = vor.u32 1.1754944e-38, %v984
    %v986 = vsel %vm983, %v985, %v981
    %v987 = vmul.f32 %v962, %v986
    %v988 = vmin.f32 %v987, 1.0
    %v989 = vmax.f32 %v988, -1.0
    %v990 = vadd.f32 %v869, 1.0
    %v991 = vadd.f32 %v909, 1.0
    %v992 = vadd.f32 %v949, 1.0
    %v993 = vadd.f32 %v989, 1.0
    %v994 = vmul.f32 %v822, %v990
    %v995 = vmul.f32 %v823, %v991
    %v996 = vmul.f32 %v824, %v992
    %v997 = vmul.f32 %v825, %v993
    %v998 = vpack.c.bf16 %v995, %v994
    %v999 = vpack.c.bf16 %v997, %v996
    %v1000 = vperm.slane %v86, 0
    %v1005 = vunpack.c.l.b16 %v75
    %v1006 = vunpack.c.l.b16 %v76
    %v1007 = vunpack.c.l.b16 %v77
    %v1008 = vunpack.c.l.b16 %v78
    %v1009 = vpack.c.b16 %v1006, %v1005
    %v1010 = vpack.c.b16 %v1008, %v1007
    %1013 = vmatpush.bf16.xpose.msra.mxu0 0
    %1014 = vmatpush.bf16.xpose.msra.mxu0 0
    %1015 = vmatpush.bf16.xpose.msra.mxu0 0
    %1016 = vmatpush.bf16.xpose.msra.mxu0 0
    %1017 = vmatpush.bf16.xpose.msra.mxu0 0
    %1018 = vmatpush.bf16.xpose.msra.mxu0 0
    %1019 = vmatpush.bf16.xpose.msra.mxu0 %v1010
    %1020 = vmatpush.bf16.xpose.msra.mxu0 %v1009
    %1021 = vmatmul.bf16.gmra.mxu0 %v998
    %v1022 = vpop.f32.mrf.mxu0
    %v1023 = vadd.f32 %v1000, %v1022
    %v1024 = vpop.f32.mrf.mxu0
    %v1025 = vadd.f32 %v1000, %v1024
    %1026 = vmatmul.bf16.gmra.mxu0 %v999
    %v1027 = vpop.f32.mrf.mxu0
    %v1028 = vadd.f32 %v1000, %v1027
    %v1029 = vpop.f32.mrf.mxu0
    %v1030 = vadd.f32 %v1000, %v1029
    %1031 = vdwg.mxu0
    %v1032 = vadd.f32 %v690, %v1023
    %v1033 = vadd.f32 %v691, %v1025
    %v1034 = vadd.f32 %v692, %v1028
    %v1035 = vadd.f32 %v693, %v1030
    %1036 = vst.msk [vmem:[#allocation8] sm:$0xff] %vm123, %v1032
    %1037 = vst.msk [vmem:[#allocation8 + $0x8] sm:$0xff] %vm123, %v1033
    %1038 = vst.msk [vmem:[#allocation8 + $0x10] sm:$0xff] %vm123, %v1034
    %1039 = vst.msk [vmem:[#allocation8 + $0x18] sm:$0xff] %vm123, %v1035
    // Predicated region
    $region26: #{block_forward.1} parent=1 // pred_check
      _
    $region27: #{block_forward.1} parent=1 // pred_check_branch
      %1041 = sbr.rel (0) target = $region29
    $region28: #{block_forward.1} parent=1 // pred_region
      %1043 = vsyncadd [#allocation4], 0
      %s1044 = sshll.u32 [#allocation8], 4
      %s1045 = int_to_ptr.vmem [resolvable:$true] %s1044
      %s1046 = sshll.u32 %s3, 4
      %s1047 = int_to_ptr.hbm [resolvable:$true] %s1046
      %1052 = dma.vmem_to_hbm [thread:$0]  %s1045, 512, %s1047, [#allocation4], 128, 128, 8
    $region29: #{block_forward.1} parent=1 // pred_fallthru
      _
    // Predicated region
    $region30: #{block_forward.1} parent=1 // pred_check
      _
    $region31: #{block_forward.1} parent=1 // pred_check_branch
      %1054 = sbr.rel (0) target = $region33
    $region32: #{block_forward.1} parent=1 // pred_region
      %1056 = dma.done [#allocation4], 512
    $region33: #{block_forward.1} parent=1 // pred_fallthru
      _
    %1057 = vsyncpa [#allocation3], 1
    %1058 = vsyncpa [#allocation6], 1
    %1059 = vsyncpa [#allocation4], 1

</llo_original>
